<compile_context>
chip_gen: v5e
topology: v5e:2x2
jax: 0.10.0
libtpu: 0.0.40
codegen_flags: <defaults>
</compile_context>

<pallas_src>
import functools

import jax
import jax.numpy as jnp
from jax.experimental import pallas as pl
from jax.experimental.pallas import tpu as pltpu


# --------------------------------------------------------------------------------------
# Helpers
# --------------------------------------------------------------------------------------
def _make_pair_indices(num_inputs):
    row, col = [], []
    for i in range(num_inputs - 1):
        for j in range(i + 1, num_inputs):
            row.append(i)
            col.append(j)
    return row, col


def _device_kind():
    try:
        return jax.devices()[0].device_kind.lower()
    except Exception:
        return ""


def _default_mxu_width():
    kind = _device_kind()
    # 128x128 MXUs through v5e; 256x256 on v6e / v7x.
    if any(tag in kind for tag in ("v2", "v3", "v4", "v5")):
        return 128
    return 256


def _vmem_budget_bytes():
    kind = _device_kind()
    if "7" in kind:                      # v7x: 64 MiB physical VMEM -> leave headroom
        return 44 * 1024 * 1024
    return 96 * 1024 * 1024              # v5e / v6e: 128 MiB physical VMEM


# --------------------------------------------------------------------------------------
# Kernel
# --------------------------------------------------------------------------------------
def _outter_product_kernel(e_ref, w_ref, out_ref, *, row, col, num_groups, group, embed):
    # e_ref  : (N, E, TB)       bf16  full field slab, batch lane-dense
    # w_ref  : (NG, G*E, G*E)   bf16  block-diagonal packed weights (VMEM resident)
    # out_ref: (P_pad, TB)      f32
    G, E = group, embed
    for g in range(num_groups):
        base = g * G
        # In-kernel pair gather: static leading-dim slices of the field slab, stacked
        # along sublanes into one MXU-wide operand (E is a multiple of 8 -> aligned copies).
        if G > 1:
            p_g = jnp.concatenate([e_ref[row[base + k]] for k in range(G)], axis=0)
            q_g = jnp.concatenate([e_ref[col[base + k]] for k in range(G)], axis=0)
        else:
            p_g = e_ref[row[base]]
            q_g = e_ref[col[base]]

        # One full-width MXU push per group: (G*E2, G*E1) @ (G*E1, TB) -> (G*E2, TB) f32.
        tmp = jnp.dot(w_ref[g], p_g, preferred_element_type=jnp.float32)

        # Streaming epilogue (consumed immediately, stays in vregs/small VMEM):
        # f32 MXU result * bf16 q slab (cast fuses per-vreg), then sublane-reduce over
        # E2 inside each pair block -> (G, TB), lane-dense store.
        prod = tmp * q_g
        out_ref[pl.ds(base, G), :] = prod.reshape(G, E, prod.shape[1]).sum(axis=1)


# --------------------------------------------------------------------------------------
# Wrapper
# --------------------------------------------------------------------------------------
def outter_product_layer_mat(embed_list, kernel, *, compute_dtype=jnp.bfloat16,
                             tb=512, mxu_width=None, transpose_output=True):
    """OutterProductLayer forward (kernel_type='mat').

    embed_list: list of N arrays (B, 1, E); kernel: (E, P, E) with P = N*(N-1)/2.
    Returns (B, P) float32 (module layout).  Callers that can consume the lane-dense
    (P, B) layout directly can pass transpose_output=False to skip the final transpose.
    """
    num_inputs = len(embed_list)
    row, col = _make_pair_indices(num_inputs)

    e_all = jnp.concatenate(embed_list, axis=1)                    # (B, N, E)
    B, N, E = e_all.shape
    P = len(row)
    assert kernel.shape == (E, P, E)

    # ---- pair-group packing matched to the MXU width ---------------------------------
    if mxu_width is None:
        mxu_width = _default_mxu_width()
    if E % 8 == 0 and E <= mxu_width:
        G = max(1, mxu_width // E)        # pairs per MXU push (8 on v6e/v7x, 4 on v5e @ E=32)
    else:
        G = 1                             # fallback: per-pair blocks
    NG = (P + G - 1) // G
    P_pad = NG * G
    GE = G * E

    # Padded pairs get zero weight blocks -> their output rows are zero and sliced off.
    row_pad = tuple(row + [0] * (P_pad - P))
    col_pad = tuple(col + [0] * (P_pad - P))

    # Block-diagonal packed W: w_bd[n, k*E+e2, k*E+e1] = W[e2, n*G+k, e1], zeros elsewhere.
    w_t = jnp.transpose(kernel, (1, 0, 2))                         # (P, E2, E1)
    if P_pad > P:
        w_t = jnp.pad(w_t, ((0, P_pad - P), (0, 0), (0, 0)))
    wb = w_t.reshape(NG, G, E, E)
    eye = jnp.eye(G, dtype=w_t.dtype)
    w_bd = jnp.einsum("ngij,gh->ngihj", wb, eye).reshape(NG, GE, GE).astype(compute_dtype)

    # Lane-dense field slab: batch on lanes, E on sublanes, fields leading (small: B*N*E).
    e_t = jnp.transpose(e_all, (1, 2, 0)).astype(compute_dtype)    # (N, E, B)

    # ---- batch tile / VMEM budget ------------------------------------------------------
    in_elt = jnp.dtype(compute_dtype).itemsize
    budget = _vmem_budget_bytes()

    def vmem_estimate(tb_):
        return (2 * N * E * tb_ * in_elt            # e_t tile (double-buffered)
                + 2 * NG * GE * GE * in_elt         # resident packed W (2 pipeline bufs)
                + 2 * P_pad * tb_ * 4               # out tile (double-buffered)
                + 2 * GE * tb_ * (2 * in_elt + 8))  # live per-group operands/intermediates

    if B > tb:
        TB = max(128, (tb // 128) * 128)
        while TB > 128 and vmem_estimate(TB) > budget:
            TB = max(128, (TB // 2) // 128 * 128)
    else:
        TB = B
    grid = (pl.cdiv(B, TB),)

    vmem_limit = int(min(budget, max(32 * 1024 * 1024,
                                     vmem_estimate(TB) + 16 * 1024 * 1024)))

    cost = pl.CostEstimate(
        flops=2 * B * P_pad * G * E * E + 3 * B * P_pad * E,
        transcendentals=0,
        bytes_accessed=int(B * N * E * in_elt + NG * GE * GE * in_elt + B * P_pad * 4),
    )

    kernel_fn = functools.partial(
        _outter_product_kernel,
        row=row_pad, col=col_pad, num_groups=NG, group=G, embed=E)

    out_pb = pl.pallas_call(
        kernel_fn,
        out_shape=jax.ShapeDtypeStruct((P_pad, B), jnp.float32),
        grid=grid,
        in_specs=[
            pl.BlockSpec((N, E, TB), lambda i: (0, 0, i)),       # field slab: streams over B
            pl.BlockSpec((NG, GE, GE), lambda i: (0, 0, 0)),     # packed W: VMEM-resident
        ],
        out_specs=pl.BlockSpec((P_pad, TB), lambda i: (0, i)),   # lane-dense (P, B) blocks
        compiler_params=pltpu.CompilerParams(
            dimension_semantics=("parallel",),                   # shard B over v7x's 2 TCs
            vmem_limit_bytes=vmem_limit,
        ),
        cost_estimate=cost,
    )(e_t, w_bd)

    out_pb = out_pb[:P]                                          # drop padded pair rows
    if transpose_output:
        # TODO(synk): for callers that can consume (P, B) directly, pass
        #             transpose_output=False to skip this final XLA transpose pass.
        return jnp.transpose(out_pb, (1, 0))                     # (B, P) module layout
    return out_pb                                                # (P, B) lane-dense layout


# --------------------------------------------------------------------------------------
# Reference + test
# --------------------------------------------------------------------------------------
def _reference_jax(embed_list, w, dtype=jnp.float32):
    num_inputs = len(embed_list)
    row, col = _make_pair_indices(num_inputs)
    p = jnp.concatenate([embed_list[idx] for idx in row], axis=1)  # (B, P, E)
    q = jnp.concatenate([embed_list[idx] for idx in col], axis=1)  # (B, P, E)
    return jnp.einsum(
        "bpi,epi,bpe->bp",
        p.astype(dtype), w.astype(dtype), q.astype(dtype),
        preferred_element_type=jnp.float32,
    )


if __name__ == "__main__":
    # Small, deterministic setup consistent with the module's forward.
    field_size = 4        # N
    embedding_size = 32   # E
    batch = 2             # B
    num_pairs = field_size * (field_size - 1) // 2  # P = 6

    key = jax.random.PRNGKey(0)
    k_embed, k_kernel = jax.random.split(key)

    embed_keys = jax.random.split(k_embed, field_size)
    embed_list = [
        jax.random.normal(k, (batch, 1, embedding_size), dtype=jnp.float32)
        for k in embed_keys
    ]

    # nn.init.uniform_(kernel) -> U(0, 1), shape (E, P, E) for kernel_type='mat'
    w = jax.random.uniform(
        k_kernel, (embedding_size, num_pairs, embedding_size), dtype=jnp.float32
    )

    out = outter_product_layer_mat(embed_list, w)
    out = jax.block_until_ready(out)
    assert out.shape == (batch, num_pairs)

    # Tight check against a reference at matching (bf16-input, f32-accumulate) precision.
    ref_bf16 = _reference_jax(embed_list, w, dtype=jnp.bfloat16)
    assert jnp.allclose(out, ref_bf16, atol=1e-2, rtol=1e-2), (out, ref_bf16)

    # Loose sanity check against the full-f32 reference (bf16 input rounding only).
    ref_f32 = _reference_jax(embed_list, w, dtype=jnp.float32)
    assert jnp.allclose(out, ref_f32, atol=5e-1, rtol=5e-2), (out, ref_f32)

    print("KERNEL_OK")
</pallas_src>

<mosaic_0001>
module attributes {stable_mosaic.version = 11 : i64} {
  func.func @_outter_product_kernel(%arg0: i32, %arg1: memref<4x32x2xbf16, #tpu.memory_space<vmem>>, %arg2: memref<1x256x256xbf16, #tpu.memory_space<vmem>>, %arg3: memref<8x2xf32, #tpu.memory_space<vmem>>) attributes {dimension_semantics = [#tpu.dimension_semantics<parallel>], iteration_bounds = array<i64: 1>, scalar_prefetch = 0 : i64, scratch_operands = 0 : i64, tpu.core_type = #tpu.core_type<tc>, window_params = [{transform_indices = @transform_0, window_bounds = array<i64: 4, 32, 2>}, {pipeline_mode = #tpu.pipeline_mode<synchronous>, transform_indices = @transform_1, window_bounds = array<i64: 1, 256, 256>}, {transform_indices = @transform_2, window_bounds = array<i64: 8, 2>}]} {
    %c0 = arith.constant 0 : index
    %c0_0 = arith.constant 0 : index
    %c0_1 = arith.constant 0 : index
    %0 = vector.load %arg1[%c0, %c0_0, %c0_1] : memref<4x32x2xbf16, #tpu.memory_space<vmem>>, vector<1x32x2xbf16>
    %1 = vector.shape_cast %0 : vector<1x32x2xbf16> to vector<32x2xbf16>
    %c0_2 = arith.constant 0 : index
    %c0_3 = arith.constant 0 : index
    %c0_4 = arith.constant 0 : index
    %2 = vector.load %arg1[%c0_2, %c0_3, %c0_4] : memref<4x32x2xbf16, #tpu.memory_space<vmem>>, vector<1x32x2xbf16>
    %3 = vector.shape_cast %2 : vector<1x32x2xbf16> to vector<32x2xbf16>
    %c0_5 = arith.constant 0 : index
    %c0_6 = arith.constant 0 : index
    %c0_7 = arith.constant 0 : index
    %4 = vector.load %arg1[%c0_5, %c0_6, %c0_7] : memref<4x32x2xbf16, #tpu.memory_space<vmem>>, vector<1x32x2xbf16>
    %5 = vector.shape_cast %4 : vector<1x32x2xbf16> to vector<32x2xbf16>
    %c1 = arith.constant 1 : index
    %c0_8 = arith.constant 0 : index
    %c0_9 = arith.constant 0 : index
    %6 = vector.load %arg1[%c1, %c0_8, %c0_9] : memref<4x32x2xbf16, #tpu.memory_space<vmem>>, vector<1x32x2xbf16>
    %7 = vector.shape_cast %6 : vector<1x32x2xbf16> to vector<32x2xbf16>
    %c1_10 = arith.constant 1 : index
    %c0_11 = arith.constant 0 : index
    %c0_12 = arith.constant 0 : index
    %8 = vector.load %arg1[%c1_10, %c0_11, %c0_12] : memref<4x32x2xbf16, #tpu.memory_space<vmem>>, vector<1x32x2xbf16>
    %9 = vector.shape_cast %8 : vector<1x32x2xbf16> to vector<32x2xbf16>
    %c2 = arith.constant 2 : index
    %c0_13 = arith.constant 0 : index
    %c0_14 = arith.constant 0 : index
    %10 = vector.load %arg1[%c2, %c0_13, %c0_14] : memref<4x32x2xbf16, #tpu.memory_space<vmem>>, vector<1x32x2xbf16>
    %11 = vector.shape_cast %10 : vector<1x32x2xbf16> to vector<32x2xbf16>
    %c0_15 = arith.constant 0 : index
    %c0_16 = arith.constant 0 : index
    %c0_17 = arith.constant 0 : index
    %12 = vector.load %arg1[%c0_15, %c0_16, %c0_17] : memref<4x32x2xbf16, #tpu.memory_space<vmem>>, vector<1x32x2xbf16>
    %13 = vector.shape_cast %12 : vector<1x32x2xbf16> to vector<32x2xbf16>
    %c0_18 = arith.constant 0 : index
    %c0_19 = arith.constant 0 : index
    %c0_20 = arith.constant 0 : index
    %14 = vector.load %arg1[%c0_18, %c0_19, %c0_20] : memref<4x32x2xbf16, #tpu.memory_space<vmem>>, vector<1x32x2xbf16>
    %15 = vector.shape_cast %14 : vector<1x32x2xbf16> to vector<32x2xbf16>
    %16 = tpu.concatenate %1, %3, %5, %7, %9, %11, %13, %15 in 0 : vector<32x2xbf16>, vector<32x2xbf16>, vector<32x2xbf16>, vector<32x2xbf16>, vector<32x2xbf16>, vector<32x2xbf16>, vector<32x2xbf16>, vector<32x2xbf16> -> vector<256x2xbf16>
    %c1_21 = arith.constant 1 : index
    %c0_22 = arith.constant 0 : index
    %c0_23 = arith.constant 0 : index
    %17 = vector.load %arg1[%c1_21, %c0_22, %c0_23] : memref<4x32x2xbf16, #tpu.memory_space<vmem>>, vector<1x32x2xbf16>
    %18 = vector.shape_cast %17 : vector<1x32x2xbf16> to vector<32x2xbf16>
    %c2_24 = arith.constant 2 : index
    %c0_25 = arith.constant 0 : index
    %c0_26 = arith.constant 0 : index
    %19 = vector.load %arg1[%c2_24, %c0_25, %c0_26] : memref<4x32x2xbf16, #tpu.memory_space<vmem>>, vector<1x32x2xbf16>
    %20 = vector.shape_cast %19 : vector<1x32x2xbf16> to vector<32x2xbf16>
    %c3 = arith.constant 3 : index
    %c0_27 = arith.constant 0 : index
    %c0_28 = arith.constant 0 : index
    %21 = vector.load %arg1[%c3, %c0_27, %c0_28] : memref<4x32x2xbf16, #tpu.memory_space<vmem>>, vector<1x32x2xbf16>
    %22 = vector.shape_cast %21 : vector<1x32x2xbf16> to vector<32x2xbf16>
    %c2_29 = arith.constant 2 : index
    %c0_30 = arith.constant 0 : index
    %c0_31 = arith.constant 0 : index
    %23 = vector.load %arg1[%c2_29, %c0_30, %c0_31] : memref<4x32x2xbf16, #tpu.memory_space<vmem>>, vector<1x32x2xbf16>
    %24 = vector.shape_cast %23 : vector<1x32x2xbf16> to vector<32x2xbf16>
    %c3_32 = arith.constant 3 : index
    %c0_33 = arith.constant 0 : index
    %c0_34 = arith.constant 0 : index
    %25 = vector.load %arg1[%c3_32, %c0_33, %c0_34] : memref<4x32x2xbf16, #tpu.memory_space<vmem>>, vector<1x32x2xbf16>
    %26 = vector.shape_cast %25 : vector<1x32x2xbf16> to vector<32x2xbf16>
    %c3_35 = arith.constant 3 : index
    %c0_36 = arith.constant 0 : index
    %c0_37 = arith.constant 0 : index
    %27 = vector.load %arg1[%c3_35, %c0_36, %c0_37] : memref<4x32x2xbf16, #tpu.memory_space<vmem>>, vector<1x32x2xbf16>
    %28 = vector.shape_cast %27 : vector<1x32x2xbf16> to vector<32x2xbf16>
    %c0_38 = arith.constant 0 : index
    %c0_39 = arith.constant 0 : index
    %c0_40 = arith.constant 0 : index
    %29 = vector.load %arg1[%c0_38, %c0_39, %c0_40] : memref<4x32x2xbf16, #tpu.memory_space<vmem>>, vector<1x32x2xbf16>
    %30 = vector.shape_cast %29 : vector<1x32x2xbf16> to vector<32x2xbf16>
    %c0_41 = arith.constant 0 : index
    %c0_42 = arith.constant 0 : index
    %c0_43 = arith.constant 0 : index
    %31 = vector.load %arg1[%c0_41, %c0_42, %c0_43] : memref<4x32x2xbf16, #tpu.memory_space<vmem>>, vector<1x32x2xbf16>
    %32 = vector.shape_cast %31 : vector<1x32x2xbf16> to vector<32x2xbf16>
    %33 = tpu.concatenate %18, %20, %22, %24, %26, %28, %30, %32 in 0 : vector<32x2xbf16>, vector<32x2xbf16>, vector<32x2xbf16>, vector<32x2xbf16>, vector<32x2xbf16>, vector<32x2xbf16>, vector<32x2xbf16>, vector<32x2xbf16> -> vector<256x2xbf16>
    %c0_44 = arith.constant 0 : index
    %c0_45 = arith.constant 0 : index
    %c0_46 = arith.constant 0 : index
    %34 = vector.load %arg2[%c0_44, %c0_45, %c0_46] : memref<1x256x256xbf16, #tpu.memory_space<vmem>>, vector<1x256x256xbf16>
    %35 = vector.shape_cast %34 : vector<1x256x256xbf16> to vector<256x256xbf16>
    %cst = arith.constant dense<0.000000e+00> : vector<256x2xf32>
    %36 = tpu.matmul %35, %16, %cst {dimension_numbers = #tpu.dot_dimension_numbers<[1], [0], [0], [1], [0, 0, 1, 1], [], []>} : vector<256x256xbf16>, vector<256x2xbf16>, vector<256x2xf32> -> vector<256x2xf32>
    %37 = arith.extf %33 : vector<256x2xbf16> to vector<256x2xf32>
    %38 = arith.mulf %36, %37 : vector<256x2xf32>
    %39 = vector.shape_cast %38 : vector<256x2xf32> to vector<8x32x2xf32>
    %cst_47 = arith.constant dense<0.000000e+00> : vector<8x2xf32>
    %40 = vector.multi_reduction <add>, %39, %cst_47 [1] : vector<8x32x2xf32> to vector<8x2xf32>
    %c0_48 = arith.constant 0 : index
    %c0_49 = arith.constant 0 : index
    %41 = vector.load %arg3[%c0_48, %c0_49] : memref<8x2xf32, #tpu.memory_space<vmem>>, vector<8x2xf32>
    tpu.vector_store %arg3[%c0_48, %c0_49], %40 {strides = array<i32>} : memref<8x2xf32, #tpu.memory_space<vmem>>, vector<8x2xf32>,
    return
  }
  func.func @transform_0(%arg0: i32) -> (i32, i32, i32) {
    %c0_i32 = arith.constant 0 : i32
    %c0_i32_0 = arith.constant 0 : i32
    %c0_i32_1 = arith.constant 0 : i32
    return %c0_i32, %c0_i32_0, %arg0 : i32, i32, i32
  }
  func.func @transform_1(%arg0: i32) -> (i32, i32, i32) {
    %c0_i32 = arith.constant 0 : i32
    %c0_i32_0 = arith.constant 0 : i32
    %c0_i32_1 = arith.constant 0 : i32
    %c0_i32_2 = arith.constant 0 : i32
    return %c0_i32, %c0_i32_0, %c0_i32_1 : i32, i32, i32
  }
  func.func @transform_2(%arg0: i32) -> (i32, i32) {
    %c0_i32 = arith.constant 0 : i32
    %c0_i32_0 = arith.constant 0 : i32
    return %c0_i32, %arg0 : i32, i32
  }
}

</mosaic_0001>

<llo_original>
// kernel: tpu_custom_call.1
$region0: #{tpu_custom_call.1}
  #allocation0 [shape = 'u32[]', space=smem, size = 0x4, offset = 0x4, fixed_abs, tag = 'smem constant byte address 0x4 - core index']
  #allocation1 [shape = 'u32[72,128]{1,0:T(1,128)}', space=vmem, size = 0x9000, scoped, tag = 'internal scratch']
  %s0 = inlined_call_operand.vmem [shape: bf16[4,32,2], index: 0, kind: input, shape index: {}]
  %s1 = inlined_call_operand.hbm [shape: bf16[1,256,256], index: 1, kind: input, shape index: {}]
  %s2 = inlined_call_operand.vmem [shape: f32[8,2], index: 2, kind: output, shape index: {}]
  %s3 = sld [smem:[#allocation0]]
  $region22: #{tpu_custom_call.1} parent=0
    _
  %s5 = ssub.s32 1, %s3
  %s6 = scalar_select 0, %s5, %s3
  $region1: #{tpu_custom_call.1} parent=0
    #allocation2 [shape = 'u8[131072]{0}', space=vmem, size = 0x20000, scoped, tag = 'input window, operand 1, single buffered']
    #allocation3 [shape = 's32[1]{0}', space=sflag, size = 0x4, scoped, tag = 'scoped memory for tpu_custom_call.1']
    %7 = vsyncpa [#allocation3], 0
    // Predicated region
    $region2: #{tpu_custom_call.1} parent=1 // pred_check
      _
    $region3: #{tpu_custom_call.1} parent=1 // pred_check_branch
      %9 = sbr.rel (0) target = $region5
    $region4: #{tpu_custom_call.1} parent=1 // pred_region
      _
    $region5: #{tpu_custom_call.1} parent=1 // pred_fallthru
      _
    // Predicated region
    $region6: #{tpu_custom_call.1} parent=1 // pred_check
      _
    $region7: #{tpu_custom_call.1} parent=1 // pred_check_branch
      %11 = sbr.rel (0) target = $region9
    $region8: #{tpu_custom_call.1} parent=1 // pred_region
      %13 = vsyncadd [#allocation3], 0
      %s14 = sshll.u32 %s1, 4
      %s15 = int_to_ptr.hbm [resolvable:$true] %s14
      %s16 = sshll.u32 [#allocation2], 4
      %s17 = int_to_ptr.vmem [resolvable:$true] %s16
      %22 = dma.hbm_to_vmem [thread:$0]  %s15, 4096, %s17, [#allocation3], 128, 128, 8
    $region9: #{tpu_custom_call.1} parent=1 // pred_fallthru
      _
    // Predicated region
    $region10: #{tpu_custom_call.1} parent=1 // pred_check
      _
    $region11: #{tpu_custom_call.1} parent=1 // pred_check_branch
      %24 = sbr.rel (0) target = $region13
    $region12: #{tpu_custom_call.1} parent=1 // pred_region
      %26 = dma.done [#allocation3], 4096
    $region13: #{tpu_custom_call.1} parent=1 // pred_fallthru
      _
    %v27 = vld [vmem:[%s0] sm:$0xf]
    %v28 = vld [vmem:[%s0 + $0x4] sm:$0xf]
    %v29 = vld [vmem:[%s0 + $0x8] sm:$0xf]
    %v30 = vld [vmem:[%s0 + $0xc] sm:$0xf]
    %s31 = scalar_lea.vmem %s0, 16
    %v32 = vld [vmem:[%s31] sm:$0xf]
    %v33 = vld [vmem:[%s31 + $0x4] sm:$0xf]
    %v34 = vld [vmem:[%s31 + $0x8] sm:$0xf]
    %v35 = vld [vmem:[%s31 + $0xc] sm:$0xf]
    %s36 = scalar_lea.vmem %s0, 32
    %v37 = vld [vmem:[%s36] sm:$0xf]
    %v38 = vld [vmem:[%s36 + $0x4] sm:$0xf]
    %v39 = vld [vmem:[%s36 + $0x8] sm:$0xf]
    %v40 = vld [vmem:[%s36 + $0xc] sm:$0xf]
    %v45 = vunpack.c.l.b16 %v27
    %v46 = vunpack.c.l.b16 %v28
    %v47 = vunpack.c.l.b16 %v29
    %v48 = vunpack.c.l.b16 %v30
    %v49 = vpack.c.b16 %v46, %v45
    %v50 = vpack.c.b16 %v48, %v47
    %v57 = vunpack.c.l.b16 %v32
    %v58 = vunpack.c.l.b16 %v33
    %v59 = vunpack.c.l.b16 %v34
    %v60 = vunpack.c.l.b16 %v35
    %v61 = vpack.c.b16 %v58, %v57
    %v62 = vpack.c.b16 %v60, %v59
    %v69 = vunpack.c.l.b16 %v37
    %v70 = vunpack.c.l.b16 %v38
    %v71 = vunpack.c.l.b16 %v39
    %v72 = vunpack.c.l.b16 %v40
    %v73 = vpack.c.b16 %v70, %v69
    %v74 = vpack.c.b16 %v72, %v71
    %s77 = scalar_lea.vmem %s0, 48
    %v78 = vld [vmem:[%s77] sm:$0xf]
    %v79 = vld [vmem:[%s77 + $0x4] sm:$0xf]
    %v80 = vld [vmem:[%s77 + $0x8] sm:$0xf]
    %v81 = vld [vmem:[%s77 + $0xc] sm:$0xf]
    %v86 = vunpack.c.l.b16 %v78
    %v87 = vunpack.c.l.b16 %v79
    %v88 = vunpack.c.l.b16 %v80
    %v89 = vunpack.c.l.b16 %v81
    %v90 = vpack.c.b16 %v87, %v86
    %v91 = vpack.c.b16 %v89, %v88
    %v94 = vld [vmem:[#allocation2] sm:$0xff]
    %v95 = vld [vmem:[#allocation2 + $0x8] sm:$0xff]
    %v96 = vld [vmem:[#allocation2 + $0x10] sm:$0xff]
    %v97 = vld [vmem:[#allocation2 + $0x18] sm:$0xff]
    %v98 = vld [vmem:[#allocation2 + $0x20] sm:$0xff]
    %v99 = vld [vmem:[#allocation2 + $0x28] sm:$0xff]
    %v100 = vld [vmem:[#allocation2 + $0x30] sm:$0xff]
    %v101 = vld [vmem:[#allocation2 + $0x38] sm:$0xff]
    %v102 = vld [vmem:[#allocation2 + $0x40] sm:$0xff]
    %v103 = vld [vmem:[#allocation2 + $0x48] sm:$0xff]
    %v104 = vld [vmem:[#allocation2 + $0x50] sm:$0xff]
    %v105 = vld [vmem:[#allocation2 + $0x58] sm:$0xff]
    %v106 = vld [vmem:[#allocation2 + $0x60] sm:$0xff]
    %v107 = vld [vmem:[#allocation2 + $0x68] sm:$0xff]
    %v108 = vld [vmem:[#allocation2 + $0x70] sm:$0xff]
    %v109 = vld [vmem:[#allocation2 + $0x78] sm:$0xff]
    %v110 = vld [vmem:[#allocation2 + $0x80] sm:$0xff]
    %v111 = vld [vmem:[#allocation2 + $0x88] sm:$0xff]
    %v112 = vld [vmem:[#allocation2 + $0x90] sm:$0xff]
    %v113 = vld [vmem:[#allocation2 + $0x98] sm:$0xff]
    %v114 = vld [vmem:[#allocation2 + $0xa0] sm:$0xff]
    %v115 = vld [vmem:[#allocation2 + $0xa8] sm:$0xff]
    %v116 = vld [vmem:[#allocation2 + $0xb0] sm:$0xff]
    %v117 = vld [vmem:[#allocation2 + $0xb8] sm:$0xff]
    %v118 = vld [vmem:[#allocation2 + $0xc0] sm:$0xff]
    %v119 = vld [vmem:[#allocation2 + $0xc8] sm:$0xff]
    %v120 = vld [vmem:[#allocation2 + $0xd0] sm:$0xff]
    %v121 = vld [vmem:[#allocation2 + $0xd8] sm:$0xff]
    %v122 = vld [vmem:[#allocation2 + $0xe0] sm:$0xff]
    %v123 = vld [vmem:[#allocation2 + $0xe8] sm:$0xff]
    %v124 = vld [vmem:[#allocation2 + $0xf0] sm:$0xff]
    %v125 = vld [vmem:[#allocation2 + $0xf8] sm:$0xff]
    %v158 = vunpack.c.l.b16 %v94
    %v159 = vunpack.c.h.b16 %v94
    %v160 = vunpack.c.l.b16 %v95
    %v161 = vunpack.c.h.b16 %v95
    %v162 = vunpack.c.l.b16 %v96
    %v163 = vunpack.c.h.b16 %v96
    %v164 = vunpack.c.l.b16 %v97
    %v165 = vunpack.c.h.b16 %v97
    %v166 = vunpack.c.l.b16 %v98
    %v167 = vunpack.c.h.b16 %v98
    %v168 = vunpack.c.l.b16 %v99
    %v169 = vunpack.c.h.b16 %v99
    %v170 = vunpack.c.l.b16 %v100
    %v171 = vunpack.c.h.b16 %v100
    %v172 = vunpack.c.l.b16 %v101
    %v173 = vunpack.c.h.b16 %v101
    %v174 = vunpack.c.l.b16 %v102
    %v175 = vunpack.c.h.b16 %v102
    %v176 = vunpack.c.l.b16 %v103
    %v177 = vunpack.c.h.b16 %v103
    %v178 = vunpack.c.l.b16 %v104
    %v179 = vunpack.c.h.b16 %v104
    %v180 = vunpack.c.l.b16 %v105
    %v181 = vunpack.c.h.b16 %v105
    %v182 = vunpack.c.l.b16 %v106
    %v183 = vunpack.c.h.b16 %v106
    %v184 = vunpack.c.l.b16 %v107
    %v185 = vunpack.c.h.b16 %v107
    %v186 = vunpack.c.l.b16 %v108
    %v187 = vunpack.c.h.b16 %v108
    %v188 = vunpack.c.l.b16 %v109
    %v189 = vunpack.c.h.b16 %v109
    %v190 = vunpack.c.l.b16 %v110
    %v191 = vunpack.c.h.b16 %v110
    %v192 = vunpack.c.l.b16 %v111
    %v193 = vunpack.c.h.b16 %v111
    %v194 = vunpack.c.l.b16 %v112
    %v195 = vunpack.c.h.b16 %v112
    %v196 = vunpack.c.l.b16 %v113
    %v197 = vunpack.c.h.b16 %v113
    %v198 = vunpack.c.l.b16 %v114
    %v199 = vunpack.c.h.b16 %v114
    %v200 = vunpack.c.l.b16 %v115
    %v201 = vunpack.c.h.b16 %v115
    %v202 = vunpack.c.l.b16 %v116
    %v203 = vunpack.c.h.b16 %v116
    %v204 = vunpack.c.l.b16 %v117
    %v205 = vunpack.c.h.b16 %v117
    %v206 = vunpack.c.l.b16 %v118
    %v207 = vunpack.c.h.b16 %v118
    %v208 = vunpack.c.l.b16 %v119
    %v209 = vunpack.c.h.b16 %v119
    %v210 = vunpack.c.l.b16 %v120
    %v211 = vunpack.c.h.b16 %v120
    %v212 = vunpack.c.l.b16 %v121
    %v213 = vunpack.c.h.b16 %v121
    %v214 = vunpack.c.l.b16 %v122
    %v215 = vunpack.c.h.b16 %v122
    %v216 = vunpack.c.l.b16 %v123
    %v217 = vunpack.c.h.b16 %v123
    %v218 = vunpack.c.l.b16 %v124
    %v219 = vunpack.c.h.b16 %v124
    %v220 = vunpack.c.l.b16 %v125
    %v221 = vunpack.c.h.b16 %v125
    %v222 = vpack.c.b16 %v160, %v158
    %v223 = vpack.c.b16 %v161, %v159
    %v224 = vpack.c.b16 %v164, %v162
    %v225 = vpack.c.b16 %v165, %v163
    %v226 = vpack.c.b16 %v168, %v166
    %v227 = vpack.c.b16 %v169, %v167
    %v228 = vpack.c.b16 %v172, %v170
    %v229 = vpack.c.b16 %v173, %v171
    %v230 = vpack.c.b16 %v176, %v174
    %v231 = vpack.c.b16 %v177, %v175
    %v232 = vpack.c.b16 %v180, %v178
    %v233 = vpack.c.b16 %v181, %v179
    %v234 = vpack.c.b16 %v184, %v182
    %v235 = vpack.c.b16 %v185, %v183
    %v236 = vpack.c.b16 %v188, %v186
    %v237 = vpack.c.b16 %v189, %v187
    %v238 = vpack.c.b16 %v192, %v190
    %v239 = vpack.c.b16 %v193, %v191
    %v240 = vpack.c.b16 %v196, %v194
    %v241 = vpack.c.b16 %v197, %v195
    %v242 = vpack.c.b16 %v200, %v198
    %v243 = vpack.c.b16 %v201, %v199
    %v244 = vpack.c.b16 %v204, %v202
    %v245 = vpack.c.b16 %v205, %v203
    %v246 = vpack.c.b16 %v208, %v206
    %v247 = vpack.c.b16 %v209, %v207
    %v248 = vpack.c.b16 %v212, %v210
    %v249 = vpack.c.b16 %v213, %v211
    %v250 = vpack.c.b16 %v216, %v214
    %v251 = vpack.c.b16 %v217, %v215
    %v252 = vpack.c.b16 %v220, %v218
    %v253 = vpack.c.b16 %v221, %v219
    %286 = vmatpush.bf16.msra.mxu0 %v62
    %287 = vmatpush.bf16.msra.mxu0 %v61
    %288 = vmatpush.bf16.msra.mxu0 %v50
    %289 = vmatpush.bf16.msra.mxu0 %v49
    %290 = vmatpush.bf16.msra.mxu0 %v50
    %291 = vmatpush.bf16.msra.mxu0 %v49
    %292 = vmatpush.bf16.msra.mxu0 %v50
    %293 = vmatpush.bf16.msra.mxu0 %v49
    %294 = vmatmul.bf16.gmra.mxu0 %v222
    %v295 = vpop.f32.mrf.mxu0
    %v296 = vadd.f32 0.0, %v295
    %v297 = vpop.f32.mrf.mxu0
    %v298 = vadd.f32 0.0, %v297
    %299 = vmatmul.bf16.gmra.mxu0 %v224
    %v300 = vpop.f32.mrf.mxu0
    %v301 = vadd.f32 0.0, %v300
    %v302 = vpop.f32.mrf.mxu0
    %v303 = vadd.f32 0.0, %v302
    %304 = vmatmul.bf16.gmra.mxu0 %v226
    %v305 = vpop.f32.mrf.mxu0
    %v306 = vadd.f32 0.0, %v305
    %v307 = vpop.f32.mrf.mxu0
    %v308 = vadd.f32 0.0, %v307
    %309 = vmatmul.bf16.gmra.mxu0 %v228
    %v310 = vpop.f32.mrf.mxu0
    %v311 = vadd.f32 0.0, %v310
    %v312 = vpop.f32.mrf.mxu0
    %v313 = vadd.f32 0.0, %v312
    %314 = vmatmul.bf16.gmra.mxu0 %v230
    %v315 = vpop.f32.mrf.mxu0
    %v316 = vadd.f32 0.0, %v315
    %v317 = vpop.f32.mrf.mxu0
    %v318 = vadd.f32 0.0, %v317
    %319 = vmatmul.bf16.gmra.mxu0 %v232
    %v320 = vpop.f32.mrf.mxu0
    %v321 = vadd.f32 0.0, %v320
    %v322 = vpop.f32.mrf.mxu0
    %v323 = vadd.f32 0.0, %v322
    %324 = vmatmul.bf16.gmra.mxu0 %v234
    %v325 = vpop.f32.mrf.mxu0
    %v326 = vadd.f32 0.0, %v325
    %v327 = vpop.f32.mrf.mxu0
    %v328 = vadd.f32 0.0, %v327
    %329 = vmatmul.bf16.gmra.mxu0 %v236
    %v330 = vpop.f32.mrf.mxu0
    %v331 = vadd.f32 0.0, %v330
    %v332 = vpop.f32.mrf.mxu0
    %v333 = vadd.f32 0.0, %v332
    %334 = vmatmul.bf16.gmra.mxu0 %v238
    %v335 = vpop.f32.mrf.mxu0
    %v336 = vadd.f32 0.0, %v335
    %v337 = vpop.f32.mrf.mxu0
    %v338 = vadd.f32 0.0, %v337
    %339 = vmatmul.bf16.gmra.mxu0 %v240
    %v340 = vpop.f32.mrf.mxu0
    %v341 = vadd.f32 0.0, %v340
    %v342 = vpop.f32.mrf.mxu0
    %v343 = vadd.f32 0.0, %v342
    %344 = vmatmul.bf16.gmra.mxu0 %v242
    %v345 = vpop.f32.mrf.mxu0
    %v346 = vadd.f32 0.0, %v345
    %v347 = vpop.f32.mrf.mxu0
    %v348 = vadd.f32 0.0, %v347
    %349 = vmatmul.bf16.gmra.mxu0 %v244
    %v350 = vpop.f32.mrf.mxu0
    %v351 = vadd.f32 0.0, %v350
    %v352 = vpop.f32.mrf.mxu0
    %v353 = vadd.f32 0.0, %v352
    %354 = vmatmul.bf16.gmra.mxu0 %v246
    %v355 = vpop.f32.mrf.mxu0
    %v356 = vadd.f32 0.0, %v355
    %v357 = vpop.f32.mrf.mxu0
    %v358 = vadd.f32 0.0, %v357
    %359 = vmatmul.bf16.gmra.mxu0 %v248
    %v360 = vpop.f32.mrf.mxu0
    %v361 = vadd.f32 0.0, %v360
    %v362 = vpop.f32.mrf.mxu0
    %v363 = vadd.f32 0.0, %v362
    %364 = vmatmul.bf16.gmra.mxu0 %v250
    %v365 = vpop.f32.mrf.mxu0
    %v366 = vadd.f32 0.0, %v365
    %v367 = vpop.f32.mrf.mxu0
    %v368 = vadd.f32 0.0, %v367
    %369 = vmatmul.bf16.gmra.mxu0 %v252
    %v370 = vpop.f32.mrf.mxu0
    %v371 = vadd.f32 0.0, %v370
    %v372 = vpop.f32.mrf.mxu0
    %v373 = vadd.f32 0.0, %v372
    %374 = vdwg.mxu0
    %375 = vmatpush.bf16.msra.mxu0 %v50
    %376 = vmatpush.bf16.msra.mxu0 %v49
    %377 = vmatpush.bf16.msra.mxu0 %v50
    %378 = vmatpush.bf16.msra.mxu0 %v49
    %379 = vmatpush.bf16.msra.mxu0 %v74
    %380 = vmatpush.bf16.msra.mxu0 %v73
    %381 = vmatpush.bf16.msra.mxu0 %v62
    %382 = vmatpush.bf16.msra.mxu0 %v61
    %383 = vmatmul.bf16.gmra.mxu0 %v223
    %v384 = vpop.f32.mrf.mxu0
    %v385 = vadd.f32 %v296, %v384
    %v386 = vpop.f32.mrf.mxu0
    %v387 = vadd.f32 %v298, %v386
    %388 = vmatmul.bf16.gmra.mxu0 %v225
    %v389 = vpop.f32.mrf.mxu0
    %v390 = vadd.f32 %v301, %v389
    %v391 = vpop.f32.mrf.mxu0
    %v392 = vadd.f32 %v303, %v391
    %393 = vmatmul.bf16.gmra.mxu0 %v227
    %v394 = vpop.f32.mrf.mxu0
    %v395 = vadd.f32 %v306, %v394
    %v396 = vpop.f32.mrf.mxu0
    %v397 = vadd.f32 %v308, %v396
    %398 = vmatmul.bf16.gmra.mxu0 %v229
    %v399 = vpop.f32.mrf.mxu0
    %v400 = vadd.f32 %v311, %v399
    %v401 = vpop.f32.mrf.mxu0
    %v402 = vadd.f32 %v313, %v401
    %403 = vmatmul.bf16.gmra.mxu0 %v231
    %v404 = vpop.f32.mrf.mxu0
    %v405 = vadd.f32 %v316, %v404
    %v406 = vpop.f32.mrf.mxu0
    %v407 = vadd.f32 %v318, %v406
    %408 = vmatmul.bf16.gmra.mxu0 %v233
    %v409 = vpop.f32.mrf.mxu0
    %v410 = vadd.f32 %v321, %v409
    %v411 = vpop.f32.mrf.mxu0
    %v412 = vadd.f32 %v323, %v411
    %413 = vmatmul.bf16.gmra.mxu0 %v235
    %v414 = vpop.f32.mrf.mxu0
    %v415 = vadd.f32 %v326, %v414
    %v416 = vpop.f32.mrf.mxu0
    %v417 = vadd.f32 %v328, %v416
    %418 = vmatmul.bf16.gmra.mxu0 %v237
    %v419 = vpop.f32.mrf.mxu0
    %v420 = vadd.f32 %v331, %v419
    %v421 = vpop.f32.mrf.mxu0
    %v422 = vadd.f32 %v333, %v421
    %423 = vmatmul.bf16.gmra.mxu0 %v239
    %v424 = vpop.f32.mrf.mxu0
    %v425 = vadd.f32 %v336, %v424
    %v426 = vpop.f32.mrf.mxu0
    %v427 = vadd.f32 %v338, %v426
    %428 = vmatmul.bf16.gmra.mxu0 %v241
    %v429 = vpop.f32.mrf.mxu0
    %v430 = vadd.f32 %v341, %v429
    %v431 = vpop.f32.mrf.mxu0
    %v432 = vadd.f32 %v343, %v431
    %433 = vmatmul.bf16.gmra.mxu0 %v243
    %v434 = vpop.f32.mrf.mxu0
    %v435 = vadd.f32 %v346, %v434
    %v436 = vpop.f32.mrf.mxu0
    %v437 = vadd.f32 %v348, %v436
    %438 = vmatmul.bf16.gmra.mxu0 %v245
    %v439 = vpop.f32.mrf.mxu0
    %v440 = vadd.f32 %v351, %v439
    %v441 = vpop.f32.mrf.mxu0
    %v442 = vadd.f32 %v353, %v441
    %443 = vmatmul.bf16.gmra.mxu0 %v247
    %v444 = vpop.f32.mrf.mxu0
    %v445 = vadd.f32 %v356, %v444
    %v446 = vpop.f32.mrf.mxu0
    %v447 = vadd.f32 %v358, %v446
    %448 = vmatmul.bf16.gmra.mxu0 %v249
    %v449 = vpop.f32.mrf.mxu0
    %v450 = vadd.f32 %v361, %v449
    %v451 = vpop.f32.mrf.mxu0
    %v452 = vadd.f32 %v363, %v451
    %453 = vmatmul.bf16.gmra.mxu0 %v251
    %v454 = vpop.f32.mrf.mxu0
    %v455 = vadd.f32 %v366, %v454
    %v456 = vpop.f32.mrf.mxu0
    %v457 = vadd.f32 %v368, %v456
    %458 = vmatmul.bf16.gmra.mxu0 %v253
    %v459 = vpop.f32.mrf.mxu0
    %v460 = vadd.f32 %v371, %v459
    %v461 = vpop.f32.mrf.mxu0
    %v462 = vadd.f32 %v373, %v461
    %463 = vdwg.mxu0
    %v464 = vunpack.c.l.bf16 %v61
    %v465 = vunpack.c.h.bf16 %v61
    %v466 = vunpack.c.l.bf16 %v62
    %v467 = vunpack.c.h.bf16 %v62
    %v468 = vunpack.c.l.bf16 %v73
    %v469 = vunpack.c.h.bf16 %v73
    %v470 = vunpack.c.l.bf16 %v74
    %v471 = vunpack.c.h.bf16 %v74
    %v472 = vunpack.c.l.bf16 %v90
    %v473 = vunpack.c.h.bf16 %v90
    %v474 = vunpack.c.l.bf16 %v91
    %v475 = vunpack.c.h.bf16 %v91
    %v476 = vunpack.c.l.bf16 %v49
    %v477 = vunpack.c.h.bf16 %v49
    %v478 = vunpack.c.l.bf16 %v50
    %v479 = vunpack.c.h.bf16 %v50
    %v480 = vmul.f32 %v385, %v464
    %v481 = vmul.f32 %v387, %v465
    %v482 = vmul.f32 %v390, %v466
    %v483 = vmul.f32 %v392, %v467
    %v484 = vmul.f32 %v395, %v468
    %v485 = vmul.f32 %v397, %v469
    %v486 = vmul.f32 %v400, %v470
    %v487 = vmul.f32 %v402, %v471
    %v488 = vmul.f32 %v405, %v472
    %v489 = vmul.f32 %v407, %v473
    %v490 = vmul.f32 %v410, %v474
    %v491 = vmul.f32 %v412, %v475
    %v492 = vmul.f32 %v415, %v468
    %v493 = vmul.f32 %v417, %v469
    %v494 = vmul.f32 %v420, %v470
    %v495 = vmul.f32 %v422, %v471
    %v496 = vmul.f32 %v425, %v472
    %v497 = vmul.f32 %v427, %v473
    %v498 = vmul.f32 %v430, %v474
    %v499 = vmul.f32 %v432, %v475
    %v500 = vmul.f32 %v435, %v472
    %v501 = vmul.f32 %v437, %v473
    %v502 = vmul.f32 %v440, %v474
    %v503 = vmul.f32 %v442, %v475
    %v504 = vmul.f32 %v445, %v476
    %v505 = vmul.f32 %v447, %v477
    %v506 = vmul.f32 %v450, %v478
    %v507 = vmul.f32 %v452, %v479
    %v508 = vmul.f32 %v455, %v476
    %v509 = vmul.f32 %v457, %v477
    %v510 = vmul.f32 %v460, %v478
    %v511 = vmul.f32 %v462, %v479
    %vm512 = vcmask 15360
    %v513 = vsel %vm512, %v480, 0.0
    %v514 = vsel %vm512, %v481, 0.0
    %v515 = vadd.f32 %v513, %v514
    %v516 = vsel %vm512, %v482, 0.0
    %v517 = vadd.f32 %v515, %v516
    %v518 = vsel %vm512, %v483, 0.0
    %v519 = vadd.f32 %v517, %v518
    %v520 = vrot.slane %v519, 4
    %v521 = vadd.f32 %v519, %v520
    %v522 = vrot.slane %v521, 2
    %v523 = vadd.f32 %v521, %v522
    %v524 = vrot.slane %v523, 1
    %v525 = vadd.f32 %v523, %v524
    %v526 = vsel %vm512, %v484, 0.0
    %v527 = vsel %vm512, %v485, 0.0
    %v528 = vadd.f32 %v526, %v527
    %v529 = vsel %vm512, %v486, 0.0
    %v530 = vadd.f32 %v528, %v529
    %v531 = vsel %vm512, %v487, 0.0
    %v532 = vadd.f32 %v530, %v531
    %v533 = vrot.slane %v532, 4
    %v534 = vadd.f32 %v532, %v533
    %v535 = vrot.slane %v534, 2
    %v536 = vadd.f32 %v534, %v535
    %v537 = vrot.slane %v536, 1
    %v538 = vadd.f32 %v536, %v537
    %v539 = vsel %vm512, %v488, 0.0
    %v540 = vsel %vm512, %v489, 0.0
    %v541 = vadd.f32 %v539, %v540
    %v542 = vsel %vm512, %v490, 0.0
    %v543 = vadd.f32 %v541, %v542
    %v544 = vsel %vm512, %v491, 0.0
    %v545 = vadd.f32 %v543, %v544
    %v546 = vrot.slane %v545, 4
    %v547 = vadd.f32 %v545, %v546
    %v548 = vrot.slane %v547, 2
    %v549 = vadd.f32 %v547, %v548
    %v550 = vrot.slane %v549, 1
    %v551 = vadd.f32 %v549, %v550
    %v552 = vsel %vm512, %v492, 0.0
    %v553 = vsel %vm512, %v493, 0.0
    %v554 = vadd.f32 %v552, %v553
    %v555 = vsel %vm512, %v494, 0.0
    %v556 = vadd.f32 %v554, %v555
    %v557 = vsel %vm512, %v495, 0.0
    %v558 = vadd.f32 %v556, %v557
    %v559 = vrot.slane %v558, 4
    %v560 = vadd.f32 %v558, %v559
    %v561 = vrot.slane %v560, 2
    %v562 = vadd.f32 %v560, %v561
    %v563 = vrot.slane %v562, 1
    %v564 = vadd.f32 %v562, %v563
    %v565 = vsel %vm512, %v496, 0.0
    %v566 = vsel %vm512, %v497, 0.0
    %v567 = vadd.f32 %v565, %v566
    %v568 = vsel %vm512, %v498, 0.0
    %v569 = vadd.f32 %v567, %v568
    %v570 = vsel %vm512, %v499, 0.0
    %v571 = vadd.f32 %v569, %v570
    %v572 = vrot.slane %v571, 4
    %v573 = vadd.f32 %v571, %v572
    %v574 = vrot.slane %v573, 2
    %v575 = vadd.f32 %v573, %v574
    %v576 = vrot.slane %v575, 1
    %v577 = vadd.f32 %v575, %v576
    %v578 = vsel %vm512, %v500, 0.0
    %v579 = vsel %vm512, %v501, 0.0
    %v580 = vadd.f32 %v578, %v579
    %v581 = vsel %vm512, %v502, 0.0
    %v582 = vadd.f32 %v580, %v581
    %v583 = vsel %vm512, %v503, 0.0
    %v584 = vadd.f32 %v582, %v583
    %v585 = vrot.slane %v584, 4
    %v586 = vadd.f32 %v584, %v585
    %v587 = vrot.slane %v586, 2
    %v588 = vadd.f32 %v586, %v587
    %v589 = vrot.slane %v588, 1
    %v590 = vadd.f32 %v588, %v589
    %v591 = vsel %vm512, %v504, 0.0
    %v592 = vsel %vm512, %v505, 0.0
    %v593 = vadd.f32 %v591, %v592
    %v594 = vsel %vm512, %v506, 0.0
    %v595 = vadd.f32 %v593, %v594
    %v596 = vsel %vm512, %v507, 0.0
    %v597 = vadd.f32 %v595, %v596
    %v598 = vrot.slane %v597, 4
    %v599 = vadd.f32 %v597, %v598
    %v600 = vrot.slane %v599, 2
    %v601 = vadd.f32 %v599, %v600
    %v602 = vrot.slane %v601, 1
    %v603 = vadd.f32 %v601, %v602
    %v604 = vsel %vm512, %v508, 0.0
    %v605 = vsel %vm512, %v509, 0.0
    %v606 = vadd.f32 %v604, %v605
    %v607 = vsel %vm512, %v510, 0.0
    %v608 = vadd.f32 %v606, %v607
    %v609 = vsel %vm512, %v511, 0.0
    %v610 = vadd.f32 %v608, %v609
    %v611 = vrot.slane %v610, 4
    %v612 = vadd.f32 %v610, %v611
    %v613 = vrot.slane %v612, 2
    %v614 = vadd.f32 %v612, %v613
    %v615 = vrot.slane %v614, 1
    %v616 = vadd.f32 %v614, %v615
    %vm625 = vcmask 1041409
    %v626 = vsel %vm625, %v538, %v525
    %vm627 = vcmask 1042434
    %v628 = vsel %vm627, %v551, %v626
    %vm629 = vcmask 1043459
    %v630 = vsel %vm629, %v564, %v628
    %vm631 = vcmask 1044484
    %v632 = vsel %vm631, %v577, %v630
    %vm633 = vcmask 1045509
    %v634 = vsel %vm633, %v590, %v632
    %vm635 = vcmask 1046534
    %v636 = vsel %vm635, %v603, %v634
    %vm637 = vcmask 1047559
    %v638 = vsel %vm637, %v616, %v636
    %640 = vst.msk [vmem:[%s2] sm:$0xff] %vm512, %v638
    // Predicated region
    $region14: #{tpu_custom_call.1} parent=1 // pred_check
      _
    $region15: #{tpu_custom_call.1} parent=1 // pred_check_branch
      %642 = sbr.rel (0) target = $region17
    $region16: #{tpu_custom_call.1} parent=1 // pred_region
      _
    $region17: #{tpu_custom_call.1} parent=1 // pred_fallthru
      _
    // Predicated region
    $region18: #{tpu_custom_call.1} parent=1 // pred_check
      _
    $region19: #{tpu_custom_call.1} parent=1 // pred_check_branch
      %644 = sbr.rel (0) target = $region21
    $region20: #{tpu_custom_call.1} parent=1 // pred_region
      _
    $region21: #{tpu_custom_call.1} parent=1 // pred_fallthru
      _
    %645 = vsyncpa [#allocation3], 1

</llo_original>
